<compile_context>
chip_gen: v7x
topology: tpu7x:2x2x1
jax: 0.10.0
libtpu: 0.0.40
codegen_flags: <defaults>
</compile_context>

<pallas_src>
import functools
import math

import jax
import jax.numpy as jnp
from jax.experimental import pallas as pl
from jax.experimental.pallas import tpu as pltpu


def _nll_surv_kernel(logits_ref, label_ref, censor_ref, tcol_ref, expand_ref,
                     out_ref, *, groups, neg_log_eps):
    """One batch tile.

    logits_ref : (TB, W) native dtype, W = groups * T (lane-packed batch rows)
    label_ref  : (TB, groups) int32   (label == -1 marks a padded batch row)
    censor_ref : (TB, groups) float32
    tcol_ref   : (1, W)  float32, time index of each lane (lane % T)
    expand_ref : (groups, W) float32 0/1 matrix E[j, l] = (l // T == j)
    out_ref    : (8, W)  float32 per-tile partial sums (reduced in the wrapper)
    """
    x = logits_ref[...].astype(jnp.float32)              # upcast in-register
    lab = label_ref[...].astype(jnp.float32)             # (TB, g)
    cm1 = 1.0 - censor_ref[...].astype(jnp.float32)      # (TB, g) = 1 - censor
    tcol = tcol_ref[...]                                  # (1, W)

    tb, _ = x.shape

    # softplus(x) = -log(1 - sigmoid(x));  softplus(x) - x = -log(sigmoid(x)).
    # eps enters as a ceiling (-log eps) on the negated logs (finite at
    # extremes, matches the reference to O(eps) for moderate logits).
    sp = jnp.maximum(x, 0.0) + jnp.log(1.0 + jnp.exp(-jnp.abs(x)))
    nls = jnp.minimum(sp, neg_log_eps)          # -log(1 - haz), clamped
    nlh = jnp.minimum(sp - x, neg_log_eps)      # -log(haz),     clamped
    # (On v7x the log could be replaced by a VPU polynomial log1p to lift the
    #  EUP ceiling; kept as the exact EUP form here.)

    if groups > 1:
        # Expand per-batch-row label / (1-censor) across that row's T lanes via
        # a tiny matmul on the otherwise-idle MXU (exact for small integers).
        e = expand_ref[...]                                            # (g, W)
        lab_w = jnp.dot(lab, e, preferred_element_type=jnp.float32)    # (TB, W)
        cm1_w = jnp.dot(cm1, e, preferred_element_type=jnp.float32)    # (TB, W)
    else:
        lab_w = lab                    # (TB, 1) -> broadcasts over lanes
        cm1_w = cm1

    # Per-element loss contribution (algebraically folded):
    #   t <  label : -log(1-haz)                                    = nls
    #   t == label : -(1-c) log(haz) - c log(1-haz) = nls + (1-c)*(nlh - nls)
    #   t >  label : 0
    # Padded rows carry label == -1, so both masks are false -> exactly 0.
    contrib = jnp.where(tcol <= lab_w, nls, 0.0)
    contrib = contrib + jnp.where(tcol == lab_w, cm1_w * (nlh - nls), 0.0)

    # Reduce the tile rows to an (8, W) partial sum: plain VPU adds over
    # aligned (8, W) slabs — no cross-lane/XLU work, fully lane-dense store.
    acc = contrib[0:8, :]
    for r in range(1, tb // 8):
        acc = acc + contrib[r * 8:(r + 1) * 8, :]
    out_ref[...] = acc


def nll_surv_loss(logits, label, censor, eps=1e-8):
    """logits: (B, T) float; label: (B,)/(B,1) int in [0, T-1]; censor: (B,)/(B,1)."""
    B, T = logits.shape
    label = jnp.reshape(label, (B,)).astype(jnp.int32)
    censor = jnp.reshape(censor, (B,)).astype(jnp.float32)

    # Lane packing: g batch rows per kernel row so each row is ~128 lanes wide.
    g = max(1, 128 // T)
    w = g * T
    itemsize = jnp.dtype(logits.dtype).itemsize

    # T/dtype-aware tile height: target ~2 MiB logits blocks, multiple of 8
    # rows, capped so the f32 intermediates stay well inside VMEM everywhere.
    rows = pl.cdiv(B, g)                       # packed rows actually needed
    rows8 = pl.cdiv(rows, 8) * 8
    target_block_bytes = 2 * 1024 * 1024
    tb = (target_block_bytes // (w * itemsize)) // 8 * 8
    tb = int(max(8, min(tb, 2048, rows8)))
    num_tiles = int(pl.cdiv(rows, tb))
    r_total = num_tiles * tb
    b_pad = r_total * g

    # Pad the batch so every grid tile is full.  Padded rows get label = -1,
    # which zeroes their contribution inside the kernel (no row masking).
    if b_pad != B:
        logits = jnp.pad(logits, ((0, b_pad - B), (0, 0)))
        label = jnp.pad(label, (0, b_pad - B), constant_values=-1)
        censor = jnp.pad(censor, (0, b_pad - B))
    logits_p = jnp.reshape(logits, (r_total, w))      # row-major: free when no pad
    label_p = jnp.reshape(label, (r_total, g))
    censor_p = jnp.reshape(censor, (r_total, g))

    # Tiny constants (constant index_map -> DMA'd once, not per grid step).
    tcol = jnp.tile(jnp.arange(T, dtype=jnp.float32), g).reshape(1, w)
    expand = (jnp.arange(g, dtype=jnp.int32)[:, None]
              == (jnp.arange(w, dtype=jnp.int32) // T)[None, :]).astype(jnp.float32)

    block_bytes = tb * w * itemsize
    vmem_limit = int(min(64 * 2**20,
                         max(16 * 2**20, 2 * block_bytes + 12 * tb * w * 4)))

    cost = pl.CostEstimate(
        flops=int((12 + 4 * g) * r_total * w),
        transcendentals=int(2 * r_total * w),
        bytes_accessed=int(r_total * w * itemsize + r_total * g * 8
                           + (1 + g) * w * 4 + num_tiles * 8 * w * 4),
    )

    partials = pl.pallas_call(
        functools.partial(_nll_surv_kernel, groups=g,
                          neg_log_eps=float(-math.log(eps))),
        out_shape=jax.ShapeDtypeStruct((num_tiles * 8, w), jnp.float32),
        grid=(num_tiles,),
        in_specs=[
            pl.BlockSpec((tb, w), lambda i: (i, 0)),   # logits, native dtype
            pl.BlockSpec((tb, g), lambda i: (i, 0)),   # packed labels
            pl.BlockSpec((tb, g), lambda i: (i, 0)),   # packed censor
            pl.BlockSpec((1, w), lambda i: (0, 0)),    # lane -> time index
            pl.BlockSpec((g, w), lambda i: (0, 0)),    # expansion matrix
        ],
        out_specs=pl.BlockSpec((8, w), lambda i: (i, 0)),
        compiler_params=pltpu.CompilerParams(
            dimension_semantics=("parallel",),          # both TCs on v7x
            vmem_limit_bytes=vmem_limit),
        cost_estimate=cost,
    )(logits_p, label_p, censor_p, tcol, expand)

    # Grand sum over the tiny per-tile partials; mean over the true batch size.
    return jnp.sum(partials) / B


def _reference(logits, label, censor, eps=1e-8):
    """Pure-JAX transcription of the PyTorch forward, for a sanity check."""
    B, T = logits.shape
    label = jnp.reshape(label, (B, 1)).astype(jnp.int32)
    censor = jnp.reshape(censor, (B, 1)).astype(jnp.float32)
    haz = jax.nn.sigmoid(logits) + eps
    sur = jnp.cumprod(1.0 - haz, axis=1)
    sur_pad = jnp.concatenate([jnp.ones_like(censor), sur], axis=1)
    sur_pre = jnp.take_along_axis(sur_pad, label, axis=1)
    sur_cur = jnp.take_along_axis(sur_pad, label + 1, axis=1)
    haz_cur = jnp.take_along_axis(haz, label, axis=1)
    loss = (-(1 - censor) * jnp.log(sur_pre)
            - (1 - censor) * jnp.log(haz_cur)
            - censor * jnp.log(sur_cur))
    return jnp.mean(loss)


if __name__ == "__main__":
    key = jax.random.PRNGKey(0)
    k1, k2, k3 = jax.random.split(key, 3)

    # Spec shape: (batch_size, num_time_steps)
    B, T = 8, 16
    logits = jax.random.normal(k1, (B, T), dtype=jnp.float32)
    label = jax.random.randint(k2, (B,), 0, T, dtype=jnp.int32)
    censor = jax.random.bernoulli(k3, 0.3, (B,)).astype(jnp.float32)

    loss = jax.block_until_ready(nll_surv_loss(logits, label, censor))
    ref = _reference(logits, label, censor)
    assert jnp.isfinite(loss), "loss is not finite"
    assert jnp.allclose(loss, ref, rtol=1e-5, atol=1e-5), (loss, ref)

    # Extra coverage: batch padding (B not a multiple of packing/8) and the
    # unpacked T >= 128 path (labels kept small so the reference cumprod
    # doesn't underflow in f32).
    for (b2, t2, lmax) in ((37, 16, 16), (12, 200, 32)):
        kk = jax.random.split(jax.random.PRNGKey(b2 * 1000 + t2), 3)
        lg = jax.random.normal(kk[0], (b2, t2), dtype=jnp.float32)
        lb = jax.random.randint(kk[1], (b2,), 0, lmax, dtype=jnp.int32)
        cn = jax.random.bernoulli(kk[2], 0.3, (b2,)).astype(jnp.float32)
        got = jax.block_until_ready(nll_surv_loss(lg, lb, cn))
        want = _reference(lg, lb, cn)
        assert jnp.isfinite(got), (b2, t2)
        assert jnp.allclose(got, want, rtol=1e-4, atol=1e-4), (b2, t2, got, want)

    print("KERNEL_OK")
</pallas_src>

<mosaic_0001>
module attributes {stable_mosaic.version = 11 : i64} {
  func.func @_nll_surv_kernel(%arg0: i32, %arg1: memref<8x128xf32, #tpu.memory_space<vmem>>, %arg2: memref<8x8xi32, #tpu.memory_space<vmem>>, %arg3: memref<8x8xf32, #tpu.memory_space<vmem>>, %arg4: memref<1x128xf32, #tpu.memory_space<vmem>>, %arg5: memref<8x128xf32, #tpu.memory_space<vmem>>, %arg6: memref<8x128xf32, #tpu.memory_space<vmem>>) attributes {dimension_semantics = [#tpu.dimension_semantics<parallel>], iteration_bounds = array<i64: 1>, scalar_prefetch = 0 : i64, scratch_operands = 0 : i64, tpu.core_type = #tpu.core_type<tc>, window_params = [{transform_indices = @transform_0, window_bounds = array<i64: 8, 128>}, {transform_indices = @transform_1, window_bounds = array<i64: 8, 8>}, {transform_indices = @transform_2, window_bounds = array<i64: 8, 8>}, {pipeline_mode = #tpu.pipeline_mode<synchronous>, transform_indices = @transform_3, window_bounds = array<i64: 1, 128>}, {pipeline_mode = #tpu.pipeline_mode<synchronous>, transform_indices = @transform_4, window_bounds = array<i64: 8, 128>}, {transform_indices = @transform_5, window_bounds = array<i64: 8, 128>}]} {
    %c0 = arith.constant 0 : index
    %c0_0 = arith.constant 0 : index
    %0 = vector.load %arg1[%c0, %c0_0] : memref<8x128xf32, #tpu.memory_space<vmem>>, vector<8x128xf32>
    %c0_1 = arith.constant 0 : index
    %c0_2 = arith.constant 0 : index
    %1 = vector.load %arg2[%c0_1, %c0_2] : memref<8x8xi32, #tpu.memory_space<vmem>>, vector<8x8xi32>
    %2 = arith.sitofp %1 : vector<8x8xi32> to vector<8x8xf32>
    %c0_3 = arith.constant 0 : index
    %c0_4 = arith.constant 0 : index
    %3 = vector.load %arg3[%c0_3, %c0_4] : memref<8x8xf32, #tpu.memory_space<vmem>>, vector<8x8xf32>
    %cst = arith.constant 1.000000e+00 : f32
    %4 = vector.broadcast %cst : f32 to vector<8x8xf32>
    %5 = arith.subf %4, %3 : vector<8x8xf32>
    %c0_5 = arith.constant 0 : index
    %c0_6 = arith.constant 0 : index
    %6 = vector.load %arg4[%c0_5, %c0_6] : memref<1x128xf32, #tpu.memory_space<vmem>>, vector<1x128xf32>
    %cst_7 = arith.constant 0.000000e+00 : f32
    %7 = vector.broadcast %cst_7 : f32 to vector<8x128xf32>
    %8 = arith.maximumf %0, %7 : vector<8x128xf32>
    %9 = math.absf %0 : vector<8x128xf32>
    %cst_8 = arith.constant 0.000000e+00 : f32
    %10 = vector.broadcast %cst_8 : f32 to vector<8x128xf32>
    %11 = arith.subf %10, %9 : vector<8x128xf32>
    %12 = math.exp %11 : vector<8x128xf32>
    %cst_9 = arith.constant 1.000000e+00 : f32
    %13 = vector.broadcast %cst_9 : f32 to vector<8x128xf32>
    %14 = arith.addf %13, %12 : vector<8x128xf32>
    %15 = math.log %14 : vector<8x128xf32>
    %16 = arith.addf %8, %15 : vector<8x128xf32>
    %cst_10 = arith.constant 18.420681 : f32
    %17 = vector.broadcast %cst_10 : f32 to vector<8x128xf32>
    %18 = arith.minimumf %16, %17 : vector<8x128xf32>
    %19 = arith.subf %16, %0 : vector<8x128xf32>
    %cst_11 = arith.constant 18.420681 : f32
    %20 = vector.broadcast %cst_11 : f32 to vector<8x128xf32>
    %21 = arith.minimumf %19, %20 : vector<8x128xf32>
    %c0_12 = arith.constant 0 : index
    %c0_13 = arith.constant 0 : index
    %22 = vector.load %arg5[%c0_12, %c0_13] : memref<8x128xf32, #tpu.memory_space<vmem>>, vector<8x128xf32>
    %cst_14 = arith.constant dense<0.000000e+00> : vector<8x128xf32>
    %23 = tpu.matmul %2, %22, %cst_14 {dimension_numbers = #tpu.dot_dimension_numbers<[1], [0], [0], [1], [0, 0, 1, 1], [], []>} : vector<8x8xf32>, vector<8x128xf32>, vector<8x128xf32> -> vector<8x128xf32>
    %cst_15 = arith.constant dense<0.000000e+00> : vector<8x128xf32>
    %24 = tpu.matmul %5, %22, %cst_15 {dimension_numbers = #tpu.dot_dimension_numbers<[1], [0], [0], [1], [0, 0, 1, 1], [], []>} : vector<8x8xf32>, vector<8x128xf32>, vector<8x128xf32> -> vector<8x128xf32>
    %25 = vector.broadcast %6 : vector<1x128xf32> to vector<8x128xf32>
    %26 = arith.cmpf ole, %25, %23 : vector<8x128xf32>
    %cst_16 = arith.constant 0.000000e+00 : f32
    %27 = vector.broadcast %cst_16 : f32 to vector<8x128xf32>
    %28 = arith.select %26, %18, %27 : vector<8x128xi1>, vector<8x128xf32>
    %29 = vector.broadcast %6 : vector<1x128xf32> to vector<8x128xf32>
    %30 = arith.cmpf oeq, %29, %23 : vector<8x128xf32>
    %31 = arith.subf %21, %18 : vector<8x128xf32>
    %32 = arith.mulf %24, %31 : vector<8x128xf32>
    %cst_17 = arith.constant 0.000000e+00 : f32
    %33 = vector.broadcast %cst_17 : f32 to vector<8x128xf32>
    %34 = arith.select %30, %32, %33 : vector<8x128xi1>, vector<8x128xf32>
    %35 = arith.addf %28, %34 : vector<8x128xf32>
    %c0_18 = arith.constant 0 : index
    %c0_19 = arith.constant 0 : index
    %36 = vector.load %arg6[%c0_18, %c0_19] : memref<8x128xf32, #tpu.memory_space<vmem>>, vector<8x128xf32>
    tpu.vector_store %arg6[%c0_18, %c0_19], %35 {strides = array<i32>} : memref<8x128xf32, #tpu.memory_space<vmem>>, vector<8x128xf32>,
    return
  }
  func.func @transform_0(%arg0: i32) -> (i32, i32) {
    %c0_i32 = arith.constant 0 : i32
    %c0_i32_0 = arith.constant 0 : i32
    return %arg0, %c0_i32 : i32, i32
  }
  func.func @transform_1(%arg0: i32) -> (i32, i32) {
    %c0_i32 = arith.constant 0 : i32
    %c0_i32_0 = arith.constant 0 : i32
    return %arg0, %c0_i32 : i32, i32
  }
  func.func @transform_2(%arg0: i32) -> (i32, i32) {
    %c0_i32 = arith.constant 0 : i32
    %c0_i32_0 = arith.constant 0 : i32
    return %arg0, %c0_i32 : i32, i32
  }
  func.func @transform_3(%arg0: i32) -> (i32, i32) {
    %c0_i32 = arith.constant 0 : i32
    %c0_i32_0 = arith.constant 0 : i32
    %c0_i32_1 = arith.constant 0 : i32
    return %c0_i32, %c0_i32_0 : i32, i32
  }
  func.func @transform_4(%arg0: i32) -> (i32, i32) {
    %c0_i32 = arith.constant 0 : i32
    %c0_i32_0 = arith.constant 0 : i32
    %c0_i32_1 = arith.constant 0 : i32
    return %c0_i32, %c0_i32_0 : i32, i32
  }
  func.func @transform_5(%arg0: i32) -> (i32, i32) {
    %c0_i32 = arith.constant 0 : i32
    %c0_i32_0 = arith.constant 0 : i32
    return %arg0, %c0_i32 : i32, i32
  }
}

</mosaic_0001>

<llo_original>
// kernel: tpu_custom_call.1
$region0: #{tpu_custom_call.1}
  #allocation0 [shape = 'u32[]', space=smem, size = 0x4, offset = 0x4, fixed_abs, tag = 'smem constant byte address 0x4 - core index']
  #allocation1 [shape = 'u32[144,128]{1,0:T(1,128)}', space=vmem, size = 0x12000, scoped, tag = 'internal scratch']
  %s0 = inlined_call_operand.hbm [shape: f32[8,128], index: 0, kind: input, shape index: {}]
  %s1 = inlined_call_operand.hbm [shape: s32[8,8], index: 1, kind: input, shape index: {}]
  %s2 = inlined_call_operand.hbm [shape: f32[8,8], index: 2, kind: input, shape index: {}]
  %s3 = inlined_call_operand.vmem [shape: f32[1,128], index: 3, kind: input, shape index: {}]
  %s4 = inlined_call_operand.vmem [shape: f32[8,128], index: 4, kind: input, shape index: {}]
  %s5 = inlined_call_operand.hbm [shape: f32[8,128], index: 5, kind: output, shape index: {}]
  %s6 = sld [smem:[#allocation0]]
  $region42: #{tpu_custom_call.1} parent=0
    _
  %s8 = ssub.s32 1, %s6
  %s9 = scalar_select 0, %s8, %s6
  $region1: #{tpu_custom_call.1} parent=0
    #allocation2 [shape = 'u8[4096]{0}', space=vmem, size = 0x1000, scoped, tag = 'input window, operand 0, single buffered']
    #allocation3 [shape = 's32[1]{0}', space=sflag, size = 0x4, scoped, tag = 'scoped memory for tpu_custom_call.1']
    #allocation4 [shape = 's32[1]{0}', space=sflag, size = 0x4, scoped, tag = 'scoped memory for tpu_custom_call.1']
    #allocation5 [shape = 'u8[4096]{0}', space=vmem, size = 0x1000, scoped, tag = 'input window, operand 1, single buffered']
    #allocation6 [shape = 's32[1]{0}', space=sflag, size = 0x4, scoped, tag = 'scoped memory for tpu_custom_call.1']
    #allocation7 [shape = 'u8[4096]{0}', space=vmem, size = 0x1000, scoped, tag = 'input window, operand 2, single buffered']
    #allocation8 [shape = 'u8[4096]{0}', space=vmem, size = 0x1000, scoped, tag = 'output window, operand 0, single buffered']
    %10 = vsyncpa [#allocation3], 0
    %11 = vsyncpa [#allocation6], 0
    %12 = vsyncpa [#allocation4], 0
    // Predicated region
    $region2: #{tpu_custom_call.1} parent=1 // pred_check
      _
    $region3: #{tpu_custom_call.1} parent=1 // pred_check_branch
      %14 = sbr.rel (0) target = $region5
    $region4: #{tpu_custom_call.1} parent=1 // pred_region
      %s16 = ssub.s32 128, 128
      %17 = vsyncadd [#allocation3], %s16
      %s19 = sshll.u32 [#allocation2], 4
      %s20 = int_to_ptr.vmem [resolvable:$true] %s19
      %22 = dma.hbm_to_vmem [thread:$0]  %s0, 128, %s20, [#allocation3]
    $region5: #{tpu_custom_call.1} parent=1 // pred_fallthru
      _
    // Predicated region
    $region6: #{tpu_custom_call.1} parent=1 // pred_check
      _
    $region7: #{tpu_custom_call.1} parent=1 // pred_check_branch
      %24 = sbr.rel (0) target = $region9
    $region8: #{tpu_custom_call.1} parent=1 // pred_region
      %s26 = ssub.s32 128, 128
      %27 = vsyncadd [#allocation6], %s26
      %s29 = sshll.u32 [#allocation5], 4
      %s30 = int_to_ptr.vmem [resolvable:$true] %s29
      %32 = dma.hbm_to_vmem [thread:$0]  %s1, 128, %s30, [#allocation6]
    $region9: #{tpu_custom_call.1} parent=1 // pred_fallthru
      _
    // Predicated region
    $region10: #{tpu_custom_call.1} parent=1 // pred_check
      _
    $region11: #{tpu_custom_call.1} parent=1 // pred_check_branch
      %34 = sbr.rel (0) target = $region13
    $region12: #{tpu_custom_call.1} parent=1 // pred_region
      %s36 = ssub.s32 128, 128
      %37 = vsyncadd [#allocation6], %s36
      %s39 = sshll.u32 [#allocation7], 4
      %s40 = int_to_ptr.vmem [resolvable:$true] %s39
      %42 = dma.hbm_to_vmem [thread:$0]  %s2, 128, %s40, [#allocation6]
    $region13: #{tpu_custom_call.1} parent=1 // pred_fallthru
      _
    // Predicated region
    $region14: #{tpu_custom_call.1} parent=1 // pred_check
      _
    $region15: #{tpu_custom_call.1} parent=1 // pred_check_branch
      %44 = sbr.rel (0) target = $region17
    $region16: #{tpu_custom_call.1} parent=1 // pred_region
      _
    $region17: #{tpu_custom_call.1} parent=1 // pred_fallthru
      _
    // Predicated region
    $region18: #{tpu_custom_call.1} parent=1 // pred_check
      _
    $region19: #{tpu_custom_call.1} parent=1 // pred_check_branch
      %46 = sbr.rel (0) target = $region21
    $region20: #{tpu_custom_call.1} parent=1 // pred_region
      _
    $region21: #{tpu_custom_call.1} parent=1 // pred_fallthru
      _
    // Predicated region
    $region22: #{tpu_custom_call.1} parent=1 // pred_check
      _
    $region23: #{tpu_custom_call.1} parent=1 // pred_check_branch
      %48 = sbr.rel (0) target = $region25
    $region24: #{tpu_custom_call.1} parent=1 // pred_region
      %49 = dma.done [#allocation3], 128
    $region25: #{tpu_custom_call.1} parent=1 // pred_fallthru
      _
    // Predicated region
    $region26: #{tpu_custom_call.1} parent=1 // pred_check
      _
    $region27: #{tpu_custom_call.1} parent=1 // pred_check_branch
      %51 = sbr.rel (0) target = $region29
    $region28: #{tpu_custom_call.1} parent=1 // pred_region
      %52 = dma.done [#allocation6], 128
    $region29: #{tpu_custom_call.1} parent=1 // pred_fallthru
      _
    // Predicated region
    $region30: #{tpu_custom_call.1} parent=1 // pred_check
      _
    $region31: #{tpu_custom_call.1} parent=1 // pred_check_branch
      %54 = sbr.rel (0) target = $region33
    $region32: #{tpu_custom_call.1} parent=1 // pred_region
      %55 = dma.done [#allocation6], 128
    $region33: #{tpu_custom_call.1} parent=1 // pred_fallthru
      _
    %v56 = vld [vmem:[#allocation2] sm:$0xff]
    %v57 = vld [vmem:[#allocation5] sm:$0xff]
    %v58 = vcvt.s32.f32 %v57
    %v59 = vld [vmem:[#allocation7] sm:$0xff]
    %v60 = vsub.f32 1.0, %v59
    %v61 = vld [vmem:[%s3] sm:$0x1]
    %v62 = vmax.f32 %v56, 0.0
    %v63 = vand.u32 2147483647, %v56
    %v64 = vsub.f32 0.0, %v63
    %v65 = vmul.f32 %v64, 1.442695
    %v66 = vpow.pop %v65
    %v67 = vadd.f32 %v66, 1.0
    %v68 = vlog2.pop %v67
    %v69 = vmul.f32 %v68, 0.6931472
    %v70 = vadd.f32 %v62, %v69
    %v71 = vmin.f32 %v70, 18.420681
    %v72 = vsub.f32 %v70, %v56
    %v73 = vmin.f32 %v72, 18.420681
    %v74 = vld [vmem:[%s4] sm:$0xff]
    %vm75 = vcmask 64512
    %v77 = vsel %vm75, %v58, 0
    %79 = vmatprep.subr.mxu0 0.0
    %80 = vmatpush1.msra.mxu0 %v74
    %81 = vmatprep.subr.mxu0 0.0
    %82 = vmatpush1.msra.mxu0 0.0
    %83 = vmatprep.subr.mxu0 0.0
    %84 = vmatpush1.msra.mxu0 0.0
    %85 = vmatprep.subr.mxu0 0.0
    %86 = vmatpush1.msra.mxu0 0.0
    %87 = vmatprep.subr.mxu0 0.0
    %88 = vmatpush1.msra.mxu0 0.0
    %89 = vmatprep.subr.mxu0 0.0
    %90 = vmatpush1.msra.mxu0 0.0
    %91 = vmatprep.subr.mxu0 0.0
    %92 = vmatpush1.msra.mxu0 0.0
    %93 = vmatprep.subr.mxu0 0.0
    %94 = vmatpush1.msra.mxu0 0.0
    %95 = vmatprep.subr.mxu0 0.0
    %96 = vmatpush1.msra.mxu0 0.0
    %97 = vmatprep.subr.mxu0 0.0
    %98 = vmatpush1.msra.mxu0 0.0
    %99 = vmatprep.subr.mxu0 0.0
    %100 = vmatpush1.msra.mxu0 0.0
    %101 = vmatprep.subr.mxu0 0.0
    %102 = vmatpush1.msra.mxu0 0.0
    %103 = vmatprep.subr.mxu0 0.0
    %104 = vmatpush1.msra.mxu0 0.0
    %105 = vmatprep.subr.mxu0 0.0
    %106 = vmatpush1.msra.mxu0 0.0
    %107 = vmatprep.subr.mxu0 0.0
    %108 = vmatpush1.msra.mxu0 0.0
    %109 = vmatprep.subr.mxu0 0.0
    %110 = vmatpush1.msra.mxu0 0.0
    %111 = vmatprep.subr.mxu0 0.0
    %112 = vmatpush1.msra.mxu0 0.0
    %113 = vmatprep.subr.mxu0 0.0
    %114 = vmatpush1.msra.mxu0 0.0
    %115 = vmatprep.subr.mxu0 0.0
    %116 = vmatpush1.msra.mxu0 0.0
    %117 = vmatprep.subr.mxu0 0.0
    %118 = vmatpush1.msra.mxu0 0.0
    %119 = vmatprep.subr.mxu0 0.0
    %120 = vmatpush1.msra.mxu0 0.0
    %121 = vmatprep.subr.mxu0 0.0
    %122 = vmatpush1.msra.mxu0 0.0
    %123 = vmatprep.subr.mxu0 0.0
    %124 = vmatpush1.msra.mxu0 0.0
    %125 = vmatprep.subr.mxu0 0.0
    %126 = vmatpush1.msra.mxu0 0.0
    %127 = vmatprep.subr.mxu0 0.0
    %128 = vmatpush1.msra.mxu0 0.0
    %129 = vmatprep.subr.mxu0 0.0
    %130 = vmatpush1.msra.mxu0 0.0
    %131 = vmatprep.subr.mxu0 0.0
    %132 = vmatpush1.msra.mxu0 0.0
    %133 = vmatprep.subr.mxu0 0.0
    %134 = vmatpush1.msra.mxu0 0.0
    %135 = vmatprep.subr.mxu0 0.0
    %136 = vmatpush1.msra.mxu0 0.0
    %137 = vmatprep.subr.mxu0 0.0
    %138 = vmatpush1.msra.mxu0 0.0
    %139 = vmatprep.subr.mxu0 0.0
    %140 = vmatpush1.msra.mxu0 0.0
    %141 = vmatprep.subr.mxu0 0.0
    %142 = vmatpush1.msra.mxu0 0.0
    %143 = vmatprep.mubr.f32.mxu0 0.0
    %144 = vmatmul.mubr.f32.gmra.mrb[0].mxu0 %v77
    %v145 = vpop.f32.mrb[0].mxu0
    %v146 = vadd.f32 0.0, %v145
    %v147 = vpop.f32.mrb[0].mxu0
    %148 = vdwg.mxu0
    %v150 = vsel %vm75, %v60, 0
    %152 = vmatprep.subr.mxu0 0.0
    %153 = vmatpush1.msra.mxu0 %v74
    %154 = vmatprep.subr.mxu0 0.0
    %155 = vmatpush1.msra.mxu0 0.0
    %156 = vmatprep.subr.mxu0 0.0
    %157 = vmatpush1.msra.mxu0 0.0
    %158 = vmatprep.subr.mxu0 0.0
    %159 = vmatpush1.msra.mxu0 0.0
    %160 = vmatprep.subr.mxu0 0.0
    %161 = vmatpush1.msra.mxu0 0.0
    %162 = vmatprep.subr.mxu0 0.0
    %163 = vmatpush1.msra.mxu0 0.0
    %164 = vmatprep.subr.mxu0 0.0
    %165 = vmatpush1.msra.mxu0 0.0
    %166 = vmatprep.subr.mxu0 0.0
    %167 = vmatpush1.msra.mxu0 0.0
    %168 = vmatprep.subr.mxu0 0.0
    %169 = vmatpush1.msra.mxu0 0.0
    %170 = vmatprep.subr.mxu0 0.0
    %171 = vmatpush1.msra.mxu0 0.0
    %172 = vmatprep.subr.mxu0 0.0
    %173 = vmatpush1.msra.mxu0 0.0
    %174 = vmatprep.subr.mxu0 0.0
    %175 = vmatpush1.msra.mxu0 0.0
    %176 = vmatprep.subr.mxu0 0.0
    %177 = vmatpush1.msra.mxu0 0.0
    %178 = vmatprep.subr.mxu0 0.0
    %179 = vmatpush1.msra.mxu0 0.0
    %180 = vmatprep.subr.mxu0 0.0
    %181 = vmatpush1.msra.mxu0 0.0
    %182 = vmatprep.subr.mxu0 0.0
    %183 = vmatpush1.msra.mxu0 0.0
    %184 = vmatprep.subr.mxu0 0.0
    %185 = vmatpush1.msra.mxu0 0.0
    %186 = vmatprep.subr.mxu0 0.0
    %187 = vmatpush1.msra.mxu0 0.0
    %188 = vmatprep.subr.mxu0 0.0
    %189 = vmatpush1.msra.mxu0 0.0
    %190 = vmatprep.subr.mxu0 0.0
    %191 = vmatpush1.msra.mxu0 0.0
    %192 = vmatprep.subr.mxu0 0.0
    %193 = vmatpush1.msra.mxu0 0.0
    %194 = vmatprep.subr.mxu0 0.0
    %195 = vmatpush1.msra.mxu0 0.0
    %196 = vmatprep.subr.mxu0 0.0
    %197 = vmatpush1.msra.mxu0 0.0
    %198 = vmatprep.subr.mxu0 0.0
    %199 = vmatpush1.msra.mxu0 0.0
    %200 = vmatprep.subr.mxu0 0.0
    %201 = vmatpush1.msra.mxu0 0.0
    %202 = vmatprep.subr.mxu0 0.0
    %203 = vmatpush1.msra.mxu0 0.0
    %204 = vmatprep.subr.mxu0 0.0
    %205 = vmatpush1.msra.mxu0 0.0
    %206 = vmatprep.subr.mxu0 0.0
    %207 = vmatpush1.msra.mxu0 0.0
    %208 = vmatprep.subr.mxu0 0.0
    %209 = vmatpush1.msra.mxu0 0.0
    %210 = vmatprep.subr.mxu0 0.0
    %211 = vmatpush1.msra.mxu0 0.0
    %212 = vmatprep.subr.mxu0 0.0
    %213 = vmatpush1.msra.mxu0 0.0
    %214 = vmatprep.subr.mxu0 0.0
    %215 = vmatpush1.msra.mxu0 0.0
    %216 = vmatprep.mubr.f32.mxu0 0.0
    %217 = vmatmul.mubr.f32.gmra.mrb[0].mxu0 %v150
    %v218 = vpop.f32.mrb[0].mxu0
    %v219 = vadd.f32 0.0, %v218
    %v220 = vpop.f32.mrb[0].mxu0
    %221 = vdwg.mxu0
    %v223 = vlaneseq
    %v224 = vshrl.u32 %v223, 7
    %v225 = vsub.s32 0, %v224
    %v226 = vrot.slane %v61, %v225
    %vm228 = vcmp.le.f32.partialorder %v226, %v146
    %v229 = vsel %vm228, %v71, 0.0
    %vm230 = vcmp.eq.f32.partialorder %v226, %v146
    %v231 = vsub.f32 %v73, %v71
    %v232 = vmul.f32 %v219, %v231
    %v233 = vsel %vm230, %v232, 0.0
    %v234 = vadd.f32 %v229, %v233
    %235 = vst [vmem:[#allocation8] sm:$0xff] %v234
    // Predicated region
    $region34: #{tpu_custom_call.1} parent=1 // pred_check
      _
    $region35: #{tpu_custom_call.1} parent=1 // pred_check_branch
      %237 = sbr.rel (0) target = $region37
    $region36: #{tpu_custom_call.1} parent=1 // pred_region
      %s239 = ssub.s32 128, 128
      %240 = vsyncadd [#allocation4], %s239
      %s242 = sshll.u32 [#allocation8], 4
      %s243 = int_to_ptr.vmem [resolvable:$true] %s242
      %245 = dma.vmem_to_hbm [thread:$0]  %s243, 128, %s5, [#allocation4]
    $region37: #{tpu_custom_call.1} parent=1 // pred_fallthru
      _
    // Predicated region
    $region38: #{tpu_custom_call.1} parent=1 // pred_check
      _
    $region39: #{tpu_custom_call.1} parent=1 // pred_check_branch
      %247 = sbr.rel (0) target = $region41
    $region40: #{tpu_custom_call.1} parent=1 // pred_region
      %248 = dma.done [#allocation4], 128
    $region41: #{tpu_custom_call.1} parent=1 // pred_fallthru
      _
    %249 = vsyncpa [#allocation3], 1
    %250 = vsyncpa [#allocation6], 1
    %251 = vsyncpa [#allocation4], 1

</llo_original>
